<compile_context>
chip_gen: v6e
topology: v6e:2x2x1
jax: 0.10.0
libtpu: 0.0.40
codegen_flags: <defaults>
</compile_context>

<pallas_src>
import functools
import math

import jax
import jax.numpy as jnp
from jax import lax
from jax.experimental import pallas as pl
from jax.experimental.pallas import tpu as pltpu

_VMEM_LIMIT = 40 * 1024 * 1024  # fits v7x's 64 MiB/TC; fine on v5e/v6e (128 MiB)


def _round_up(n, m):
    return ((n + m - 1) // m) * m


def _pick_tile(dim, target):
    """Largest tile <= target that divides dim (falls back to the full dim)."""
    if dim <= target:
        return dim
    t = target
    while t > 8 and dim % t != 0:
        t //= 2
    return t if dim % t == 0 else dim


def _choose_tile(dim, target, min_tile=128):
    """(tile, padded_dim): prefer a divisor of dim in [min_tile, target];
    otherwise pad dim up so a reasonably large tile can be used."""
    if dim <= target:
        t = _round_up(dim, 8)
        return t, t
    t = target
    while t >= min_tile:
        if dim % t == 0:
            return t, dim
        t //= 2
    t = min(target, 256)
    return t, _round_up(dim, t)


# ---------------------------------------------------------------------------
# Tiled linear kernel:  (M, K) @ (K, N) + (1, N)  -> (M, N)
# Grid (M//tm, N//tn, K//tk), f32 accumulator in VMEM scratch, K innermost.
# Operands arrive already in the compute dtype (cast once in the wrapper).
# ---------------------------------------------------------------------------
def _linear_kernel(x_ref, w_ref, b_ref, o_ref, acc_ref):
    kk = pl.program_id(2)

    @pl.when(kk == 0)
    def _init():
        acc_ref[...] = jnp.zeros_like(acc_ref)

    acc_ref[...] += jnp.dot(x_ref[...], w_ref[...],
                            preferred_element_type=jnp.float32)

    @pl.when(kk == pl.num_programs(2) - 1)
    def _finalize():
        o_ref[...] = (acc_ref[...] + b_ref[...]).astype(o_ref.dtype)


def pallas_linear(x2d, w, b, *, compute_dtype=jnp.bfloat16, out_dtype=None,
                  tm=512, tn=512, tk=1024):
    """x2d: (M, K), w: (K, N), b: (N,) -> x2d @ w + b, shape (M, N)."""
    M, K = x2d.shape
    N = w.shape[1]
    if out_dtype is None:
        out_dtype = x2d.dtype
    cdt = jnp.dtype(compute_dtype)

    tm, Mp = _choose_tile(M, tm)
    tn = _pick_tile(N, tn)
    tk = _pick_tile(K, tk)

    # Cast once here (not per-tile in the kernel); bias stays f32 (added to the
    # f32 accumulator).
    x2d = x2d.astype(cdt)
    if Mp != M:
        x2d = jnp.pad(x2d, ((0, Mp - M), (0, 0)))
    w = w.astype(cdt)
    b2 = b.reshape(1, N).astype(jnp.float32)

    grid = (Mp // tm, N // tn, K // tk)

    cost = pl.CostEstimate(
        flops=2 * Mp * N * K,
        transcendentals=0,
        bytes_accessed=int(cdt.itemsize) * (Mp * K + K * N)
        + int(jnp.dtype(out_dtype).itemsize) * Mp * N + 4 * N)

    out = pl.pallas_call(
        _linear_kernel,
        out_shape=jax.ShapeDtypeStruct((Mp, N), out_dtype),
        grid=grid,
        in_specs=[
            pl.BlockSpec((tm, tk), lambda i, j, kk: (i, kk)),
            pl.BlockSpec((tk, tn), lambda i, j, kk: (kk, j)),
            pl.BlockSpec((1, tn), lambda i, j, kk: (0, j)),
        ],
        out_specs=pl.BlockSpec((tm, tn), lambda i, j, kk: (i, j)),
        scratch_shapes=[pltpu.VMEM((tm, tn), jnp.float32)],
        compiler_params=pltpu.CompilerParams(
            dimension_semantics=("parallel", "parallel", "arbitrary"),
            vmem_limit_bytes=_VMEM_LIMIT),
        cost_estimate=cost,
    )(x2d, w, b2)

    return out[:M] if Mp != M else out


# ---------------------------------------------------------------------------
# Flash-style causal attention.
# Grid (B*H, n_q). The q/o blocks are (1, tile, hd); K/V blocks are the whole
# (1, Tp, hd) per head (constant index across the q axis -> fetched once per
# head and reused). The kv sweep is an in-kernel loop that only visits the
# causally-needed tiles: qi unmasked tiles + one masked diagonal tile.
# Running max / sum / accumulator live in f32 VMEM scratch.
# ---------------------------------------------------------------------------
def _flash_attn_kernel(q_ref, k_ref, v_ref, o_ref, m_sc, l_sc, acc_sc, *,
                       tile, approx_recip):
    qi = pl.program_id(1)

    m_sc[...] = jnp.full_like(m_sc, -jnp.inf)
    l_sc[...] = jnp.zeros_like(l_sc)
    acc_sc[...] = jnp.zeros_like(acc_sc)

    q = q_ref[0]                                  # (tile, hd), already scaled

    def accumulate(s, v):
        # s: (tile, tile) f32 scores; v: (tile, hd) compute dtype.
        m_prev = m_sc[...]
        m_new = jnp.maximum(m_prev, jnp.max(s, axis=-1, keepdims=True))
        alpha = jnp.exp(m_prev - m_new)
        p = jnp.exp(s - m_new)                    # f32 softmax math
        l_sc[...] = alpha * l_sc[...] + jnp.sum(p, axis=-1, keepdims=True)
        acc_sc[...] = alpha * acc_sc[...] + jnp.dot(
            p.astype(v.dtype), v, preferred_element_type=jnp.float32)
        m_sc[...] = m_new

    def scores(off):
        k = k_ref[0, pl.ds(off, tile), :]
        # Contract over head_dim -> no explicit k.T / XLU transpose.
        return lax.dot_general(q, k, (((1,), (1,)), ((), ())),
                               preferred_element_type=jnp.float32), \
               v_ref[0, pl.ds(off, tile), :]

    # Fully-unmasked kv tiles strictly below the diagonal: ki in [0, qi).
    @pl.loop(0, qi)
    def _unmasked(ki):
        off = pl.multiple_of(ki * tile, tile)
        s, v = scores(off)
        accumulate(s, v)

    # Diagonal tile (ki == qi): apply the causal mask (local col <= local row).
    off = pl.multiple_of(qi * tile, tile)
    s, v = scores(off)
    row = lax.broadcasted_iota(jnp.int32, (tile, tile), 0)
    col = lax.broadcasted_iota(jnp.int32, (tile, tile), 1)
    s = jnp.where(col <= row, s, -jnp.inf)
    accumulate(s, v)

    inv_l = pl.reciprocal(l_sc[...], approx=approx_recip)
    o_ref[0] = (acc_sc[...] * inv_l).astype(o_ref.dtype)


def pallas_causal_attention(q, k, v, *, compute_dtype=jnp.bfloat16,
                            out_dtype=None):
    """q, k, v: (B, H, T, hd) -> (B, H, T, hd); q is expected pre-scaled."""
    B, H, T, hd = q.shape
    if out_dtype is None:
        out_dtype = q.dtype
    cdt = jnp.dtype(compute_dtype)

    target = 512 if T >= 1024 else 256
    tile, Tp = _choose_tile(T, target)
    n_q = Tp // tile
    bh = B * H

    def prep(t):
        t = t.astype(cdt).reshape(bh, T, hd)
        if Tp != T:
            # Zero-padded keys are automatically excluded by the causal mask
            # (they only appear at/above the diagonal); padded query rows are
            # sliced off below.
            t = jnp.pad(t, ((0, 0), (0, Tp - T), (0, 0)))
        return t

    qf, kf, vf = prep(q), prep(k), prep(v)

    q_spec = pl.BlockSpec((1, tile, hd), lambda b, i: (b, i, 0))
    kv_spec = pl.BlockSpec((1, Tp, hd), lambda b, i: (b, 0, 0))
    o_spec = pl.BlockSpec((1, tile, hd), lambda b, i: (b, i, 0))

    cost = pl.CostEstimate(
        flops=2 * bh * Tp * Tp * hd,              # QK + PV, causal-halved
        transcendentals=bh * Tp * Tp // 2,
        bytes_accessed=int(cdt.itemsize) * 4 * bh * Tp * hd)

    kernel = functools.partial(
        _flash_attn_kernel, tile=tile,
        approx_recip=(cdt != jnp.dtype(jnp.float32)))

    out = pl.pallas_call(
        kernel,
        out_shape=jax.ShapeDtypeStruct((bh, Tp, hd), out_dtype),
        grid=(bh, n_q),
        in_specs=[q_spec, kv_spec, kv_spec],
        out_specs=o_spec,
        scratch_shapes=[
            pltpu.VMEM((tile, 1), jnp.float32),    # running max
            pltpu.VMEM((tile, 1), jnp.float32),    # running sum
            pltpu.VMEM((tile, hd), jnp.float32),   # output accumulator
        ],
        compiler_params=pltpu.CompilerParams(
            dimension_semantics=("parallel", "arbitrary"),
            vmem_limit_bytes=_VMEM_LIMIT),
        cost_estimate=cost,
    )(qf, kf, vf)

    out = out.reshape(B, H, Tp, hd)
    if Tp != T:
        out = out[:, :, :T, :]
    return out


# ---------------------------------------------------------------------------
# Full module forward (matches CausalSelfAttention.forward in eval mode)
# ---------------------------------------------------------------------------
def causal_self_attention(x, params, n_head, *, compute_dtype=jnp.bfloat16):
    """x: (B, T, C) float32."""
    B, T, C = x.shape
    hd = C // n_head

    w_attn = params["w_attn"]   # (C, 3C)   (= PyTorch weight.T)
    b_attn = params["b_attn"]   # (3C,)
    w_proj = params["w_proj"]   # (C, C)
    b_proj = params["b_proj"]   # (C,)

    # Fold 1/sqrt(hd) into the q-columns of the qkv projection (done in f32,
    # before any bf16 cast) so the attention kernel never rescales q.
    scale = 1.0 / math.sqrt(hd)
    col_scale = jnp.concatenate([
        jnp.full((C,), scale, dtype=w_attn.dtype),
        jnp.ones((2 * C,), dtype=w_attn.dtype)])
    w_attn_s = w_attn * col_scale
    b_attn_s = b_attn * col_scale

    # c_attn projection; output stays in the compute dtype so attention
    # streams bf16 and the head split/merge relayouts move half the bytes.
    qkv = pallas_linear(x.reshape(B * T, C), w_attn_s, b_attn_s,
                        compute_dtype=compute_dtype,
                        out_dtype=compute_dtype)               # (B*T, 3C)
    qkv = qkv.reshape(B, T, 3, n_head, hd)
    q = jnp.transpose(qkv[:, :, 0], (0, 2, 1, 3))              # (B, H, T, hd)
    k = jnp.transpose(qkv[:, :, 1], (0, 2, 1, 3))
    v = jnp.transpose(qkv[:, :, 2], (0, 2, 1, 3))

    # causal scaled-dot-product attention (dropout_p = 0 in eval mode)
    y = pallas_causal_attention(q, k, v, compute_dtype=compute_dtype,
                                out_dtype=compute_dtype)

    # merge heads back: (B, H, T, hd) -> (B, T, C)
    y = jnp.transpose(y, (0, 2, 1, 3)).reshape(B * T, C)

    # c_proj projection (+ identity resid_dropout)
    out = pallas_linear(y, w_proj, b_proj,
                        compute_dtype=compute_dtype, out_dtype=x.dtype)
    return out.reshape(B, T, C)


# ---------------------------------------------------------------------------
# Pure-JAX reference for validation
# ---------------------------------------------------------------------------
def reference(x, params, n_head):
    B, T, C = x.shape
    hd = C // n_head
    qkv = x @ params["w_attn"] + params["b_attn"]
    q, k, v = jnp.split(qkv, 3, axis=-1)
    q = q.reshape(B, T, n_head, hd).transpose(0, 2, 1, 3)
    k = k.reshape(B, T, n_head, hd).transpose(0, 2, 1, 3)
    v = v.reshape(B, T, n_head, hd).transpose(0, 2, 1, 3)
    s = jnp.einsum("bhqd,bhkd->bhqk", q, k) / math.sqrt(hd)
    mask = jnp.tril(jnp.ones((T, T), bool))
    s = jnp.where(mask[None, None], s, -jnp.inf)
    p = jax.nn.softmax(s, axis=-1)
    y = jnp.einsum("bhqk,bhkd->bhqd", p, v)
    y = y.transpose(0, 2, 1, 3).reshape(B, T, C)
    return y @ params["w_proj"] + params["b_proj"]


if __name__ == "__main__":
    # Small config consistent with the module: n_embd % n_head == 0
    B, T, C, n_head = 2, 8, 32, 4

    key = jax.random.PRNGKey(0)
    kx, kw1, kb1, kw2, kb2 = jax.random.split(key, 5)

    x = jax.random.normal(kx, (B, T, C), dtype=jnp.float32)

    # Deterministic parameter init (GPT-2-style: normal * 0.02).
    params = {
        "w_attn": jax.random.normal(kw1, (C, 3 * C), dtype=jnp.float32) * 0.02,
        "b_attn": jax.random.normal(kb1, (3 * C,), dtype=jnp.float32) * 0.02,
        "w_proj": jax.random.normal(kw2, (C, C), dtype=jnp.float32) * 0.02,
        "b_proj": jax.random.normal(kb2, (C,), dtype=jnp.float32) * 0.02,
    }

    ref = reference(x, params, n_head)

    # f32 MXU operands: tight correctness check.
    out_f32 = causal_self_attention(x, params, n_head,
                                    compute_dtype=jnp.float32)
    out_f32 = jax.block_until_ready(out_f32)
    assert out_f32.shape == (B, T, C)
    assert jnp.allclose(out_f32, ref, atol=1e-3, rtol=1e-3), \
        "f32 mismatch vs reference"

    # Default (bf16 MXU operands, f32 softmax/accumulation): loose check.
    out_bf = causal_self_attention(x, params, n_head)
    out_bf = jax.block_until_ready(out_bf)
    assert out_bf.shape == (B, T, C)
    assert bool(jnp.all(jnp.isfinite(out_bf))), "bf16 output not finite"
    assert jnp.allclose(out_bf, ref, atol=5e-2, rtol=5e-2), \
        "bf16 mismatch vs reference"

    print("KERNEL_OK")
</pallas_src>

<mosaic_0001>
module attributes {stable_mosaic.version = 11 : i64} {
  func.func @_linear_kernel(%arg0: i32, %arg1: i32, %arg2: i32, %arg3: memref<16x32xf32, #tpu.memory_space<vmem>>, %arg4: memref<32x96xf32, #tpu.memory_space<vmem>>, %arg5: memref<1x96xf32, #tpu.memory_space<vmem>>, %arg6: memref<16x96xf32, #tpu.memory_space<vmem>>, %arg7: memref<16x96xf32, #tpu.memory_space<vmem>>) attributes {dimension_semantics = [#tpu.dimension_semantics<parallel>, #tpu.dimension_semantics<parallel>, #tpu.dimension_semantics<arbitrary>], iteration_bounds = array<i64: 1, 1, 1>, scalar_prefetch = 0 : i64, scratch_operands = 1 : i64, tpu.core_type = #tpu.core_type<tc>, window_params = [{transform_indices = @transform_0, window_bounds = array<i64: 16, 32>}, {transform_indices = @transform_1, window_bounds = array<i64: 32, 96>}, {transform_indices = @transform_2, window_bounds = array<i64: 1, 96>}, {transform_indices = @transform_3, window_bounds = array<i64: 16, 96>}]} {
    %c0_i32 = arith.constant 0 : i32
    %0 = arith.cmpi eq, %arg2, %c0_i32 : i32
    %1 = arith.extui %0 : i1 to i32
    %c0_i32_0 = arith.constant 0 : i32
    %2 = arith.cmpi ne, %1, %c0_i32_0 : i32
    scf.if %2 {
      %cst_10 = arith.constant 0.000000e+00 : f32
      %12 = vector.broadcast %cst_10 : f32 to vector<16x96xf32>
      %c0_11 = arith.constant 0 : index
      %c0_12 = arith.constant 0 : index
      %13 = vector.load %arg7[%c0_11, %c0_12] : memref<16x96xf32, #tpu.memory_space<vmem>>, vector<16x96xf32>
      tpu.vector_store %arg7[%c0_11, %c0_12], %12 {strides = array<i32>} : memref<16x96xf32, #tpu.memory_space<vmem>>, vector<16x96xf32>,
    } else {
    }
    %c0 = arith.constant 0 : index
    %c0_1 = arith.constant 0 : index
    %3 = vector.load %arg7[%c0, %c0_1] : memref<16x96xf32, #tpu.memory_space<vmem>>, vector<16x96xf32>
    %c0_2 = arith.constant 0 : index
    %c0_3 = arith.constant 0 : index
    %4 = vector.load %arg3[%c0_2, %c0_3] : memref<16x32xf32, #tpu.memory_space<vmem>>, vector<16x32xf32>
    %c0_4 = arith.constant 0 : index
    %c0_5 = arith.constant 0 : index
    %5 = vector.load %arg4[%c0_4, %c0_5] : memref<32x96xf32, #tpu.memory_space<vmem>>, vector<32x96xf32>
    %cst = arith.constant dense<0.000000e+00> : vector<16x96xf32>
    %6 = tpu.matmul %4, %5, %cst {dimension_numbers = #tpu.dot_dimension_numbers<[1], [0], [0], [1], [0, 0, 1, 1], [], []>} : vector<16x32xf32>, vector<32x96xf32>, vector<16x96xf32> -> vector<16x96xf32>
    %7 = arith.addf %3, %6 : vector<16x96xf32>
    %c0_6 = arith.constant 0 : index
    %c0_7 = arith.constant 0 : index
    %8 = vector.load %arg7[%c0_6, %c0_7] : memref<16x96xf32, #tpu.memory_space<vmem>>, vector<16x96xf32>
    tpu.vector_store %arg7[%c0_6, %c0_7], %7 {strides = array<i32>} : memref<16x96xf32, #tpu.memory_space<vmem>>, vector<16x96xf32>,
    %c0_i32_8 = arith.constant 0 : i32
    %9 = arith.cmpi eq, %arg2, %c0_i32_8 : i32
    %10 = arith.extui %9 : i1 to i32
    %c0_i32_9 = arith.constant 0 : i32
    %11 = arith.cmpi ne, %10, %c0_i32_9 : i32
    scf.if %11 {
      %c0_10 = arith.constant 0 : index
      %c0_11 = arith.constant 0 : index
      %12 = vector.load %arg7[%c0_10, %c0_11] : memref<16x96xf32, #tpu.memory_space<vmem>>, vector<16x96xf32>
      %c0_12 = arith.constant 0 : index
      %c0_13 = arith.constant 0 : index
      %13 = vector.load %arg5[%c0_12, %c0_13] : memref<1x96xf32, #tpu.memory_space<vmem>>, vector<1x96xf32>
      %14 = vector.broadcast %13 : vector<1x96xf32> to vector<16x96xf32>
      %15 = arith.addf %12, %14 : vector<16x96xf32>
      %c0_14 = arith.constant 0 : index
      %c0_15 = arith.constant 0 : index
      %16 = vector.load %arg6[%c0_14, %c0_15] : memref<16x96xf32, #tpu.memory_space<vmem>>, vector<16x96xf32>
      tpu.vector_store %arg6[%c0_14, %c0_15], %15 {strides = array<i32>} : memref<16x96xf32, #tpu.memory_space<vmem>>, vector<16x96xf32>,
    } else {
    }
    return
  }
  func.func @transform_0(%arg0: i32, %arg1: i32, %arg2: i32) -> (i32, i32) {
    %c0_i32 = arith.constant 0 : i32
    return %arg0, %arg2 : i32, i32
  }
  func.func @transform_1(%arg0: i32, %arg1: i32, %arg2: i32) -> (i32, i32) {
    %c0_i32 = arith.constant 0 : i32
    return %arg2, %arg1 : i32, i32
  }
  func.func @transform_2(%arg0: i32, %arg1: i32, %arg2: i32) -> (i32, i32) {
    %c0_i32 = arith.constant 0 : i32
    %c0_i32_0 = arith.constant 0 : i32
    return %c0_i32, %arg1 : i32, i32
  }
  func.func @transform_3(%arg0: i32, %arg1: i32, %arg2: i32) -> (i32, i32) {
    %c0_i32 = arith.constant 0 : i32
    return %arg0, %arg1 : i32, i32
  }
}

</mosaic_0001>

<llo_original>
// kernel: tpu_custom_call.1
$region0: #{tpu_custom_call.1}
  #allocation0 [shape = 'u32[]', space=smem, size = 0x4, offset = 0x4, fixed_abs, tag = 'smem constant byte address 0x4 - core index']
  #allocation1 [shape = 'u32[144,128]{1,0:T(1,128)}', space=vmem, size = 0x12000, scoped, tag = 'internal scratch']
  #allocation2 [shape = 'f32[16,96]{1,0:T(8,128)}', space=vmem, size = 0x2000, scoped, tag = 'scratch operand']
  %s0 = inlined_call_operand.hbm [shape: f32[16,32], index: 0, kind: input, shape index: {}]
  %s1 = inlined_call_operand.hbm [shape: f32[32,96], index: 1, kind: input, shape index: {}]
  %s2 = inlined_call_operand.vmem [shape: f32[1,96], index: 2, kind: input, shape index: {}]
  %s3 = inlined_call_operand.hbm [shape: f32[16,96], index: 3, kind: output, shape index: {}]
  %s4 = sld [smem:[#allocation0]]
  $region38: #{tpu_custom_call.1} parent=0
    _
  %s6 = ssub.s32 1, %s4
  %s7 = scalar_select 0, %s6, %s4
  $region1: #{tpu_custom_call.1} parent=0
    #allocation3 [shape = 'u8[8192]{0}', space=vmem, size = 0x2000, scoped, tag = 'input window, operand 0, single buffered']
    #allocation4 [shape = 's32[1]{0}', space=sflag, size = 0x4, scoped, tag = 'scoped memory for tpu_custom_call.1']
    #allocation5 [shape = 's32[1]{0}', space=sflag, size = 0x4, scoped, tag = 'scoped memory for tpu_custom_call.1']
    #allocation6 [shape = 'u8[16384]{0}', space=vmem, size = 0x4000, scoped, tag = 'input window, operand 1, single buffered']
    #allocation7 [shape = 's32[1]{0}', space=sflag, size = 0x4, scoped, tag = 'scoped memory for tpu_custom_call.1']
    #allocation8 [shape = 'u8[8192]{0}', space=vmem, size = 0x2000, scoped, tag = 'output window, operand 0, single buffered']
    %8 = vsyncpa [#allocation4], 0
    %9 = vsyncpa [#allocation7], 0
    %10 = vsyncpa [#allocation5], 0
    // Predicated region
    $region2: #{tpu_custom_call.1} parent=1 // pred_check
      _
    $region3: #{tpu_custom_call.1} parent=1 // pred_check_branch
      %12 = sbr.rel (0) target = $region5
    $region4: #{tpu_custom_call.1} parent=1 // pred_region
      %s14 = ssub.s32 256, 256
      %15 = vsyncadd [#allocation4], %s14
      %s16 = sshll.u32 [#allocation3], 4
      %s17 = int_to_ptr.vmem [resolvable:$true] %s16
      %22 = dma.hbm_to_vmem [thread:$0]  %s0, 256, %s17, [#allocation4], 128, 128, 8
    $region5: #{tpu_custom_call.1} parent=1 // pred_fallthru
      _
    // Predicated region
    $region6: #{tpu_custom_call.1} parent=1 // pred_check
      _
    $region7: #{tpu_custom_call.1} parent=1 // pred_check_branch
      %24 = sbr.rel (0) target = $region9
    $region8: #{tpu_custom_call.1} parent=1 // pred_region
      %s26 = ssub.s32 512, 512
      %27 = vsyncadd [#allocation7], %s26
      %s28 = sshll.u32 [#allocation6], 4
      %s29 = int_to_ptr.vmem [resolvable:$true] %s28
      %34 = dma.hbm_to_vmem [thread:$0]  %s1, 512, %s29, [#allocation7], 128, 128, 8
    $region9: #{tpu_custom_call.1} parent=1 // pred_fallthru
      _
    // Predicated region
    $region10: #{tpu_custom_call.1} parent=1 // pred_check
      _
    $region11: #{tpu_custom_call.1} parent=1 // pred_check_branch
      %36 = sbr.rel (0) target = $region13
    $region12: #{tpu_custom_call.1} parent=1 // pred_region
      _
    $region13: #{tpu_custom_call.1} parent=1 // pred_fallthru
      _
    // Predicated region
    $region14: #{tpu_custom_call.1} parent=1 // pred_check
      _
    $region15: #{tpu_custom_call.1} parent=1 // pred_check_branch
      %38 = sbr.rel (0) target = $region17
    $region16: #{tpu_custom_call.1} parent=1 // pred_region
      %39 = dma.done [#allocation4], 256
    $region17: #{tpu_custom_call.1} parent=1 // pred_fallthru
      _
    // Predicated region
    $region18: #{tpu_custom_call.1} parent=1 // pred_check
      _
    $region19: #{tpu_custom_call.1} parent=1 // pred_check_branch
      %41 = sbr.rel (0) target = $region21
    $region20: #{tpu_custom_call.1} parent=1 // pred_region
      %42 = dma.done [#allocation7], 512
    $region21: #{tpu_custom_call.1} parent=1 // pred_fallthru
      _
    %p43 = scmp.eq.s32.totalorder 0, 0
    // Predicated region
    $region22: #{tpu_custom_call.1} parent=1 // pred_check
      %p44 = pneg %p43
    $region23: #{tpu_custom_call.1} parent=1 // pred_check_branch
      %46 = sbr.rel (%p44) target = $region25
    $region24: #{tpu_custom_call.1} parent=1 // pred_region
      %vm47 = vcmask 785408
      %48 = vst.msk [vmem:[#allocation2] sm:$0xff] %vm47, 0.0
      %49 = vst.msk [vmem:[#allocation2 + $0x8] sm:$0xff] %vm47, 0.0
    $region25: #{tpu_custom_call.1} parent=1 // pred_fallthru
      _
    %v50 = vld [vmem:[#allocation2] sm:$0xff]
    %v51 = vld [vmem:[#allocation2 + $0x8] sm:$0xff]
    %v52 = vld [vmem:[#allocation3] sm:$0xff]
    %v53 = vld [vmem:[#allocation3 + $0x8] sm:$0xff]
    %v54 = vld [vmem:[#allocation6] sm:$0xff]
    %v55 = vld [vmem:[#allocation6 + $0x8] sm:$0xff]
    %v56 = vld [vmem:[#allocation6 + $0x10] sm:$0xff]
    %v57 = vld [vmem:[#allocation6 + $0x18] sm:$0xff]
    %vm58 = vcmask 261120
    %v60 = vsel %vm58, %v52, 0
    %v63 = vsel %vm58, %v53, 0
    %65 = vmatprep.subr.mxu0 0.0
    %66 = vmatpush1.msra.mxu0 0.0
    %67 = vmatprep.subr.mxu0 0.0
    %68 = vmatpush1.msra.mxu0 0.0
    %69 = vmatprep.subr.mxu0 0.0
    %70 = vmatpush1.msra.mxu0 0.0
    %71 = vmatprep.subr.mxu0 0.0
    %72 = vmatpush1.msra.mxu0 0.0
    %73 = vmatprep.subr.mxu0 0.0
    %74 = vmatpush1.msra.mxu0 0.0
    %75 = vmatprep.subr.mxu0 0.0
    %76 = vmatpush1.msra.mxu0 0.0
    %77 = vmatprep.subr.mxu0 0.0
    %78 = vmatpush1.msra.mxu0 0.0
    %79 = vmatprep.subr.mxu0 0.0
    %80 = vmatpush1.msra.mxu0 0.0
    %81 = vmatprep.subr.mxu0 0.0
    %82 = vmatpush1.msra.mxu0 0.0
    %83 = vmatprep.subr.mxu0 0.0
    %84 = vmatpush1.msra.mxu0 0.0
    %85 = vmatprep.subr.mxu0 0.0
    %86 = vmatpush1.msra.mxu0 0.0
    %87 = vmatprep.subr.mxu0 0.0
    %88 = vmatpush1.msra.mxu0 0.0
    %89 = vmatprep.subr.mxu0 0.0
    %90 = vmatpush1.msra.mxu0 %v57
    %91 = vmatprep.subr.mxu0 0.0
    %92 = vmatpush1.msra.mxu0 %v56
    %93 = vmatprep.subr.mxu0 0.0
    %94 = vmatpush1.msra.mxu0 %v55
    %95 = vmatprep.subr.mxu0 0.0
    %96 = vmatpush1.msra.mxu0 %v54
    %97 = vmatprep.subr.mxu0 0.0
    %98 = vmatpush2.msra.mxu0 0.0
    %99 = vmatprep.subr.mxu0 0.0
    %100 = vmatpush2.msra.mxu0 0.0
    %101 = vmatprep.subr.mxu0 0.0
    %102 = vmatpush2.msra.mxu0 0.0
    %103 = vmatprep.subr.mxu0 0.0
    %104 = vmatpush2.msra.mxu0 0.0
    %105 = vmatprep.subr.mxu0 0.0
    %106 = vmatpush2.msra.mxu0 0.0
    %107 = vmatprep.subr.mxu0 0.0
    %108 = vmatpush2.msra.mxu0 0.0
    %109 = vmatprep.subr.mxu0 0.0
    %110 = vmatpush2.msra.mxu0 0.0
    %111 = vmatprep.subr.mxu0 0.0
    %112 = vmatpush2.msra.mxu0 0.0
    %113 = vmatprep.subr.mxu0 0.0
    %114 = vmatpush2.msra.mxu0 0.0
    %115 = vmatprep.subr.mxu0 0.0
    %116 = vmatpush2.msra.mxu0 0.0
    %117 = vmatprep.subr.mxu0 0.0
    %118 = vmatpush2.msra.mxu0 0.0
    %119 = vmatprep.subr.mxu0 0.0
    %120 = vmatpush2.msra.mxu0 0.0
    %121 = vmatprep.subr.mxu0 0.0
    %122 = vmatpush2.msra.mxu0 0.0
    %123 = vmatprep.subr.mxu0 0.0
    %124 = vmatpush2.msra.mxu0 0.0
    %125 = vmatprep.subr.mxu0 0.0
    %126 = vmatpush2.msra.mxu0 0.0
    %127 = vmatprep.subr.mxu0 0.0
    %128 = vmatpush2.msra.mxu0 0.0
    %129 = vmatprep.mubr.f32.mxu0 0.0
    %130 = vmatmul.mubr.f32.gmra.mxu0 %v60
    %v131 = vpop.f32.mrf.mxu0
    %v132 = vadd.f32 0.0, %v131
    %v133 = vpop.f32.mrf.mxu0
    %134 = vmatprep.mubr.f32.mxu0 0.0
    %135 = vmatmul.mubr.f32.gmra.mxu0 %v63
    %v136 = vpop.f32.mrf.mxu0
    %v137 = vadd.f32 0.0, %v136
    %v138 = vpop.f32.mrf.mxu0
    %139 = vdwg.mxu0
    %v140 = vadd.f32 %v50, %v132
    %v141 = vadd.f32 %v51, %v137
    %vm142 = vcmask 785408
    %143 = vst.msk [vmem:[#allocation2] sm:$0xff] %vm142, %v140
    %144 = vst.msk [vmem:[#allocation2 + $0x8] sm:$0xff] %vm142, %v141
    // Predicated region
    $region26: #{tpu_custom_call.1} parent=1 // pred_check
      %p145 = pneg %p43
    $region27: #{tpu_custom_call.1} parent=1 // pred_check_branch
      %147 = sbr.rel (%p145) target = $region29
    $region28: #{tpu_custom_call.1} parent=1 // pred_region
      %v148 = vld [vmem:[#allocation2] sm:$0xff]
      %v149 = vld [vmem:[#allocation2 + $0x8] sm:$0xff]
      %v150 = vld [vmem:[%s2] sm:$0x1]
      %v152 = vlaneseq
      %v153 = vshrl.u32 %v152, 7
      %v154 = vsub.s32 0, %v153
      %v155 = vrot.slane %v150, %v154
      %v157 = vadd.f32 %v148, %v155
      %v158 = vadd.f32 %v149, %v155
      %159 = vst.msk [vmem:[#allocation8] sm:$0xff] %vm142, %v157
      %160 = vst.msk [vmem:[#allocation8 + $0x8] sm:$0xff] %vm142, %v158
    $region29: #{tpu_custom_call.1} parent=1 // pred_fallthru
      _
    // Predicated region
    $region30: #{tpu_custom_call.1} parent=1 // pred_check
      _
    $region31: #{tpu_custom_call.1} parent=1 // pred_check_branch
      %162 = sbr.rel (0) target = $region33
    $region32: #{tpu_custom_call.1} parent=1 // pred_region
      %s164 = ssub.s32 256, 256
      %165 = vsyncadd [#allocation5], %s164
      %s166 = sshll.u32 [#allocation8], 4
      %s167 = int_to_ptr.vmem [resolvable:$true] %s166
      %172 = dma.vmem_to_hbm [thread:$0]  %s167, 256, %s3, [#allocation5], 128, 128, 8
    $region33: #{tpu_custom_call.1} parent=1 // pred_fallthru
      _
    // Predicated region
    $region34: #{tpu_custom_call.1} parent=1 // pred_check
      _
    $region35: #{tpu_custom_call.1} parent=1 // pred_check_branch
      %174 = sbr.rel (0) target = $region37
    $region36: #{tpu_custom_call.1} parent=1 // pred_region
      %175 = dma.done [#allocation5], 256
    $region37: #{tpu_custom_call.1} parent=1 // pred_fallthru
      _
    %176 = vsyncpa [#allocation4], 1
    %177 = vsyncpa [#allocation7], 1
    %178 = vsyncpa [#allocation5], 1

</llo_original>
